<compile_context>
chip_gen: v7x
topology: tpu7x:2x2x1
jax: 0.10.0
libtpu: 0.0.40
codegen_flags: <defaults>
</compile_context>

<pallas_src>
import functools

import jax
import jax.numpy as jnp
from jax.experimental import pallas as pl
from jax.experimental.pallas import tpu as pltpu

_LANE = 128
_DEFAULT_TILE_N = 1024   # (4096, 1024) bf16 tile = 8 MiB -> 16 MiB double-buffered.


def _round_up(x, m):
    return (x + m - 1) // m * m


def _pick_tile(dout_p, tile_n):
    """Largest tile <= tile_n that is a multiple of 128 and divides dout_p."""
    tn = min(tile_n, dout_p)
    while dout_p % tn != 0:
        tn -= _LANE
    return tn


def _fused_mlp_kernel(*refs, dims_p, tiles):
    """Whole MLP in one invocation: activations VMEM-resident, weights streamed."""
    num_layers = len(dims_p) - 1
    x_ref = refs[0]
    w_refs = [refs[1 + 2 * l] for l in range(num_layers)]   # HBM (ANY) refs
    b_refs = [refs[2 + 2 * l] for l in range(num_layers)]   # VMEM-resident biases
    o_ref = refs[1 + 2 * num_layers]
    act0, act1, wbuf, sem = refs[2 + 2 * num_layers:]
    acts = (act0, act1)

    # Flat (layer, dout-tile) schedule; weight DMAs are double-buffered across
    # layer boundaries so the HBM stream never stalls.
    schedule = [(l, j) for l in range(num_layers)
                for j in range(dims_p[l + 1] // tiles[l])]

    def tile_copy(step):
        l, j = schedule[step]
        din, tn = dims_p[l], tiles[l]
        slot = step % 2
        return pltpu.make_async_copy(
            w_refs[l].at[j],                    # (din, tn) contiguous HBM block
            wbuf.at[slot, 0:din, 0:tn],
            sem.at[slot])

    copies = [tile_copy(s) for s in range(len(schedule))]
    copies[0].start()                            # prime the pipeline

    # Bring the (tiny) input activation into the resident ping-pong buffer.
    act0[:, 0:dims_p[0]] = x_ref[...].astype(jnp.bfloat16)

    for step, (l, j) in enumerate(schedule):
        din, tn = dims_p[l], tiles[l]
        slot = step % 2
        copies[step].wait()
        if step + 1 < len(copies):
            copies[step + 1].start()             # prefetch into the other slot

        x_in = acts[l % 2][:, 0:din]                       # (B, din) bf16
        w_tile = wbuf[slot, 0:din, 0:tn]                   # (din, tn) bf16
        y = jnp.dot(x_in, w_tile, preferred_element_type=jnp.float32)
        y = y + b_refs[l][:, j * tn:(j + 1) * tn]          # (1, tn) broadcast
        if l < num_layers - 1:
            y = jnp.maximum(y, 0.0)
            acts[(l + 1) % 2][:, j * tn:(j + 1) * tn] = y.astype(jnp.bfloat16)
        else:
            o_ref[:, j * tn:(j + 1) * tn] = y


def init_mlp_params(key, in_layer, mlp_hidden, out_layer, *,
                    tile_n=_DEFAULT_TILE_N):
    """nn.Linear-style init.  Returns kernel params (pre-padded, pre-tiled,
    bf16 weights + padded f32 biases) and plain f32 params for reference."""
    dims = [in_layer] + list(mlp_hidden) + [out_layer]
    dims_p = [_round_up(d, _LANE) for d in dims]

    params, ref_params = [], []
    for l in range(len(dims) - 1):
        d_in, d_out = dims[l], dims[l + 1]
        dp_in, dp_out = dims_p[l], dims_p[l + 1]
        tn = _pick_tile(dp_out, tile_n)
        key, kw, kb = jax.random.split(key, 3)
        bound = 1.0 / float(d_in) ** 0.5
        w = jax.random.uniform(kw, (d_in, d_out), jnp.float32, -bound, bound)
        b = jax.random.uniform(kb, (1, d_out), jnp.float32, -bound, bound)
        ref_params.append((w, b))
        # Zero-pad (exact) and pre-tile so each (dp_in, tn) weight tile is one
        # contiguous HBM block for the in-kernel DMA.
        w_p = jnp.pad(w, ((0, dp_in - d_in), (0, dp_out - d_out)))
        w_t = w_p.astype(jnp.bfloat16).reshape(dp_in, dp_out // tn, tn)
        w_t = jnp.transpose(w_t, (1, 0, 2))                  # (ntiles, dp_in, tn)
        b_p = jnp.pad(b, ((0, 0), (0, dp_out - d_out)))
        params.append((w_t, b_p))
    return params, ref_params


@functools.partial(jax.jit, static_argnums=(2,))
def mlp_latent_forward(x, params, out_layer):
    batch, in_dim = x.shape
    num_layers = len(params)
    # Padded dims / tile sizes are static (derived from param shapes).
    dims_p = [params[0][0].shape[1]] + [p[1].shape[1] for p in params]
    tiles = [p[0].shape[2] for p in params]
    max_din = max(dims_p[:-1])
    max_dim = max(dims_p)
    max_tn = max(tiles)

    x_p = x
    if dims_p[0] != in_dim:
        x_p = jnp.pad(x, ((0, 0), (0, dims_p[0] - in_dim)))

    flat_args = [x_p]
    in_specs = [pl.BlockSpec(memory_space=pltpu.MemorySpace.VMEM)]
    for w_t, b_p in params:
        flat_args += [w_t, b_p]
        in_specs += [pl.BlockSpec(memory_space=pl.ANY),                  # weights in HBM
                     pl.BlockSpec(memory_space=pltpu.MemorySpace.VMEM)]  # bias resident

    flops = sum(2 * batch * dims_p[l] * dims_p[l + 1] for l in range(num_layers))
    wbytes = sum(int(w.size) * 2 + int(b.size) * 4 for w, b in params)
    cost = pl.CostEstimate(
        flops=flops, transcendentals=0,
        bytes_accessed=wbytes + int(x_p.size) * 4 + batch * dims_p[-1] * 4)

    out = pl.pallas_call(
        functools.partial(_fused_mlp_kernel,
                          dims_p=tuple(dims_p), tiles=tuple(tiles)),
        out_shape=jax.ShapeDtypeStruct((batch, dims_p[-1]), jnp.float32),
        in_specs=in_specs,
        out_specs=pl.BlockSpec(memory_space=pltpu.MemorySpace.VMEM),
        scratch_shapes=[
            pltpu.VMEM((batch, max_dim), jnp.bfloat16),       # activation ping
            pltpu.VMEM((batch, max_dim), jnp.bfloat16),       # activation pong
            pltpu.VMEM((2, max_din, max_tn), jnp.bfloat16),   # weight double buffer
            pltpu.SemaphoreType.DMA((2,)),
        ],
        compiler_params=pltpu.CompilerParams(
            vmem_limit_bytes=40 * 1024 * 1024,   # fits v7x's 64 MiB with headroom
        ),
        cost_estimate=cost,
    )(*flat_args)

    return out[:, :out_layer]


if __name__ == "__main__":
    # Small shapes consistent with MLP_latent(out_layer, in_layer, mlp_hidden).
    batch = 8
    in_layer = 128
    mlp_hidden = [256, 128, 256]   # scaled-down stand-in for [4096, 2048, 4096]
    out_layer = 64

    key = jax.random.PRNGKey(0)
    key, kx = jax.random.split(key)
    x = jax.random.normal(kx, (batch, in_layer), jnp.float32)
    params, ref_params = init_mlp_params(key, in_layer, mlp_hidden, out_layer)

    out = jax.block_until_ready(mlp_latent_forward(x, params, out_layer))

    # Pure-JAX reference with the same bf16-weight / f32-accumulate numerics.
    ref = x
    for li, (w, b) in enumerate(ref_params):
        ref = jnp.dot(ref.astype(jnp.bfloat16), w.astype(jnp.bfloat16),
                      preferred_element_type=jnp.float32) + b
        if li != len(ref_params) - 1:
            ref = jnp.maximum(ref, 0.0)

    assert out.shape == (batch, out_layer)
    err = float(jnp.max(jnp.abs(out - ref)))
    assert jnp.allclose(out, ref, atol=2e-2, rtol=2e-2), err

    print("KERNEL_OK")
</pallas_src>

<mosaic_0001>
module attributes {stable_mosaic.version = 11 : i64} {
  func.func @_fused_mlp_kernel(%arg0: memref<8x128xf32, #tpu.memory_space<vmem>>, %arg1: memref<1x128x256xbf16, #tpu.memory_space<any>>, %arg2: memref<1x256xf32, #tpu.memory_space<vmem>>, %arg3: memref<1x256x128xbf16, #tpu.memory_space<any>>, %arg4: memref<1x128xf32, #tpu.memory_space<vmem>>, %arg5: memref<1x128x256xbf16, #tpu.memory_space<any>>, %arg6: memref<1x256xf32, #tpu.memory_space<vmem>>, %arg7: memref<1x256x128xbf16, #tpu.memory_space<any>>, %arg8: memref<1x128xf32, #tpu.memory_space<vmem>>, %arg9: memref<8x128xf32, #tpu.memory_space<vmem>>, %arg10: memref<8x256xbf16, #tpu.memory_space<vmem>>, %arg11: memref<8x256xbf16, #tpu.memory_space<vmem>>, %arg12: memref<2x256x256xbf16, #tpu.memory_space<vmem>>, %arg13: memref<2x!tpu.dma_semaphore, #tpu.memory_space<semaphore_mem>>) attributes {dimension_semantics = [], scalar_prefetch = 0 : i64, scratch_operands = 4 : i64, tpu.core_type = #tpu.core_type<tc>} {
    %c0_i32 = arith.constant 0 : i32
    %c0_i32_0 = arith.constant 0 : i32
    %c0_i32_1 = arith.constant 0 : i32
    %c0_i32_2 = arith.constant 0 : i32
    %c0_i32_3 = arith.constant 0 : i32
    %0 = tpu.memref_slice %arg1[%c0_i32, %c0_i32_2, %c0_i32_3] : memref<1x128x256xbf16, #tpu.memory_space<any>> -> memref<1x128x256xbf16, #tpu.memory_space<any>>
    %1 = tpu.memref_squeeze %0 : memref<1x128x256xbf16, #tpu.memory_space<any>> -> memref<128x256xbf16, #tpu.memory_space<any>>
    %c0_i32_4 = arith.constant 0 : i32
    %c0_i32_5 = arith.constant 0 : i32
    %2 = tpu.memref_slice %arg12[%c0_i32_0, %c0_i32_4, %c0_i32_5] : memref<2x256x256xbf16, #tpu.memory_space<vmem>> -> memref<1x128x256xbf16, #tpu.memory_space<vmem>>
    %3 = tpu.memref_squeeze %2 : memref<1x128x256xbf16, #tpu.memory_space<vmem>> -> memref<128x256xbf16, #tpu.memory_space<vmem>>
    %4 = tpu.memref_slice %arg13[%c0_i32_1] : memref<2x!tpu.dma_semaphore, #tpu.memory_space<semaphore_mem>> -> memref<1x!tpu.dma_semaphore, #tpu.memory_space<semaphore_mem>>
    %5 = tpu.memref_squeeze %4 : memref<1x!tpu.dma_semaphore, #tpu.memory_space<semaphore_mem>> -> memref<!tpu.dma_semaphore, #tpu.memory_space<semaphore_mem>>
    tpu.enqueue_dma source(%1 : memref<128x256xbf16, #tpu.memory_space<any>>) target(%3 : memref<128x256xbf16, #tpu.memory_space<vmem>>) target_semaphore(%5 : memref<!tpu.dma_semaphore, #tpu.memory_space<semaphore_mem>>)
    %c0 = arith.constant 0 : index
    %c0_6 = arith.constant 0 : index
    %6 = vector.load %arg0[%c0, %c0_6] : memref<8x128xf32, #tpu.memory_space<vmem>>, vector<8x128xf32>
    %7 = arith.truncf %6 : vector<8x128xf32> to vector<8x128xbf16>
    %c0_7 = arith.constant 0 : index
    %c0_8 = arith.constant 0 : index
    %8 = vector.load %arg10[%c0_7, %c0_8] : memref<8x256xbf16, #tpu.memory_space<vmem>>, vector<8x128xbf16>
    tpu.vector_store %arg10[%c0_7, %c0_8], %7 {strides = array<i32>} : memref<8x256xbf16, #tpu.memory_space<vmem>>, vector<8x128xbf16>,
    %c0_i32_9 = arith.constant 0 : i32
    %c0_i32_10 = arith.constant 0 : i32
    %c0_i32_11 = arith.constant 0 : i32
    %c0_i32_12 = arith.constant 0 : i32
    %c0_i32_13 = arith.constant 0 : i32
    %9 = tpu.memref_slice %arg1[%c0_i32_9, %c0_i32_12, %c0_i32_13] : memref<1x128x256xbf16, #tpu.memory_space<any>> -> memref<1x128x256xbf16, #tpu.memory_space<any>>
    %10 = tpu.memref_squeeze %9 : memref<1x128x256xbf16, #tpu.memory_space<any>> -> memref<128x256xbf16, #tpu.memory_space<any>>
    %c0_i32_14 = arith.constant 0 : i32
    %c0_i32_15 = arith.constant 0 : i32
    %11 = tpu.memref_slice %arg12[%c0_i32_10, %c0_i32_14, %c0_i32_15] : memref<2x256x256xbf16, #tpu.memory_space<vmem>> -> memref<1x128x256xbf16, #tpu.memory_space<vmem>>
    %12 = tpu.memref_squeeze %11 : memref<1x128x256xbf16, #tpu.memory_space<vmem>> -> memref<128x256xbf16, #tpu.memory_space<vmem>>
    %13 = tpu.memref_slice %arg13[%c0_i32_11] : memref<2x!tpu.dma_semaphore, #tpu.memory_space<semaphore_mem>> -> memref<1x!tpu.dma_semaphore, #tpu.memory_space<semaphore_mem>>
    %14 = tpu.memref_squeeze %13 : memref<1x!tpu.dma_semaphore, #tpu.memory_space<semaphore_mem>> -> memref<!tpu.dma_semaphore, #tpu.memory_space<semaphore_mem>>
    tpu.wait_dma2 semaphore(%14 : memref<!tpu.dma_semaphore, #tpu.memory_space<semaphore_mem>>) src(%10 : memref<128x256xbf16, #tpu.memory_space<any>>) dst(%12 : memref<128x256xbf16, #tpu.memory_space<vmem>>)
    %c0_i32_16 = arith.constant 0 : i32
    %c1_i32 = arith.constant 1 : i32
    %c1_i32_17 = arith.constant 1 : i32
    %c0_i32_18 = arith.constant 0 : i32
    %c0_i32_19 = arith.constant 0 : i32
    %15 = tpu.memref_slice %arg3[%c0_i32_16, %c0_i32_18, %c0_i32_19] : memref<1x256x128xbf16, #tpu.memory_space<any>> -> memref<1x256x128xbf16, #tpu.memory_space<any>>
    %16 = tpu.memref_squeeze %15 : memref<1x256x128xbf16, #tpu.memory_space<any>> -> memref<256x128xbf16, #tpu.memory_space<any>>
    %c0_i32_20 = arith.constant 0 : i32
    %c0_i32_21 = arith.constant 0 : i32
    %17 = tpu.memref_slice %arg12[%c1_i32, %c0_i32_20, %c0_i32_21] : memref<2x256x256xbf16, #tpu.memory_space<vmem>> -> memref<1x256x128xbf16, #tpu.memory_space<vmem>>
    %18 = tpu.memref_squeeze %17 : memref<1x256x128xbf16, #tpu.memory_space<vmem>> -> memref<256x128xbf16, #tpu.memory_space<vmem>>
    %19 = tpu.memref_slice %arg13[%c1_i32_17] : memref<2x!tpu.dma_semaphore, #tpu.memory_space<semaphore_mem>> -> memref<1x!tpu.dma_semaphore, #tpu.memory_space<semaphore_mem>>
    %20 = tpu.memref_squeeze %19 : memref<1x!tpu.dma_semaphore, #tpu.memory_space<semaphore_mem>> -> memref<!tpu.dma_semaphore, #tpu.memory_space<semaphore_mem>>
    tpu.enqueue_dma source(%16 : memref<256x128xbf16, #tpu.memory_space<any>>) target(%18 : memref<256x128xbf16, #tpu.memory_space<vmem>>) target_semaphore(%20 : memref<!tpu.dma_semaphore, #tpu.memory_space<semaphore_mem>>)
    %c0_22 = arith.constant 0 : index
    %c0_23 = arith.constant 0 : index
    %21 = vector.load %arg10[%c0_22, %c0_23] : memref<8x256xbf16, #tpu.memory_space<vmem>>, vector<8x128xbf16>
    %c0_24 = arith.constant 0 : index
    %c0_25 = arith.constant 0 : index
    %c0_26 = arith.constant 0 : index
    %22 = vector.load %arg12[%c0_24, %c0_25, %c0_26] : memref<2x256x256xbf16, #tpu.memory_space<vmem>>, vector<1x128x256xbf16>
    %23 = vector.shape_cast %22 : vector<1x128x256xbf16> to vector<128x256xbf16>
    %cst = arith.constant dense<0.000000e+00> : vector<8x256xf32>
    %24 = tpu.matmul %21, %23, %cst {dimension_numbers = #tpu.dot_dimension_numbers<[1], [0], [0], [1], [0, 0, 1, 1], [], []>} : vector<8x128xbf16>, vector<128x256xbf16>, vector<8x256xf32> -> vector<8x256xf32>
    %c0_27 = arith.constant 0 : index
    %c0_28 = arith.constant 0 : index
    %25 = vector.load %arg2[%c0_27, %c0_28] : memref<1x256xf32, #tpu.memory_space<vmem>>, vector<1x256xf32>
    %26 = vector.broadcast %25 : vector<1x256xf32> to vector<8x256xf32>
    %27 = arith.addf %24, %26 : vector<8x256xf32>
    %cst_29 = arith.constant 0.000000e+00 : f32
    %28 = vector.broadcast %cst_29 : f32 to vector<8x256xf32>
    %29 = arith.maximumf %27, %28 : vector<8x256xf32>
    %30 = arith.truncf %29 : vector<8x256xf32> to vector<8x256xbf16>
    %c0_30 = arith.constant 0 : index
    %c0_31 = arith.constant 0 : index
    %31 = vector.load %arg11[%c0_30, %c0_31] : memref<8x256xbf16, #tpu.memory_space<vmem>>, vector<8x256xbf16>
    tpu.vector_store %arg11[%c0_30, %c0_31], %30 {strides = array<i32>} : memref<8x256xbf16, #tpu.memory_space<vmem>>, vector<8x256xbf16>,
    %c0_i32_32 = arith.constant 0 : i32
    %c1_i32_33 = arith.constant 1 : i32
    %c1_i32_34 = arith.constant 1 : i32
    %c0_i32_35 = arith.constant 0 : i32
    %c0_i32_36 = arith.constant 0 : i32
    %32 = tpu.memref_slice %arg3[%c0_i32_32, %c0_i32_35, %c0_i32_36] : memref<1x256x128xbf16, #tpu.memory_space<any>> -> memref<1x256x128xbf16, #tpu.memory_space<any>>
    %33 = tpu.memref_squeeze %32 : memref<1x256x128xbf16, #tpu.memory_space<any>> -> memref<256x128xbf16, #tpu.memory_space<any>>
    %c0_i32_37 = arith.constant 0 : i32
    %c0_i32_38 = arith.constant 0 : i32
    %34 = tpu.memref_slice %arg12[%c1_i32_33, %c0_i32_37, %c0_i32_38] : memref<2x256x256xbf16, #tpu.memory_space<vmem>> -> memref<1x256x128xbf16, #tpu.memory_space<vmem>>
    %35 = tpu.memref_squeeze %34 : memref<1x256x128xbf16, #tpu.memory_space<vmem>> -> memref<256x128xbf16, #tpu.memory_space<vmem>>
    %36 = tpu.memref_slice %arg13[%c1_i32_34] : memref<2x!tpu.dma_semaphore, #tpu.memory_space<semaphore_mem>> -> memref<1x!tpu.dma_semaphore, #tpu.memory_space<semaphore_mem>>
    %37 = tpu.memref_squeeze %36 : memref<1x!tpu.dma_semaphore, #tpu.memory_space<semaphore_mem>> -> memref<!tpu.dma_semaphore, #tpu.memory_space<semaphore_mem>>
    tpu.wait_dma2 semaphore(%37 : memref<!tpu.dma_semaphore, #tpu.memory_space<semaphore_mem>>) src(%33 : memref<256x128xbf16, #tpu.memory_space<any>>) dst(%35 : memref<256x128xbf16, #tpu.memory_space<vmem>>)
    %c0_i32_39 = arith.constant 0 : i32
    %c0_i32_40 = arith.constant 0 : i32
    %c0_i32_41 = arith.constant 0 : i32
    %c0_i32_42 = arith.constant 0 : i32
    %c0_i32_43 = arith.constant 0 : i32
    %38 = tpu.memref_slice %arg5[%c0_i32_39, %c0_i32_42, %c0_i32_43] : memref<1x128x256xbf16, #tpu.memory_space<any>> -> memref<1x128x256xbf16, #tpu.memory_space<any>>
    %39 = tpu.memref_squeeze %38 : memref<1x128x256xbf16, #tpu.memory_space<any>> -> memref<128x256xbf16, #tpu.memory_space<any>>
    %c0_i32_44 = arith.constant 0 : i32
    %c0_i32_45 = arith.constant 0 : i32
    %40 = tpu.memref_slice %arg12[%c0_i32_40, %c0_i32_44, %c0_i32_45] : memref<2x256x256xbf16, #tpu.memory_space<vmem>> -> memref<1x128x256xbf16, #tpu.memory_space<vmem>>
    %41 = tpu.memref_squeeze %40 : memref<1x128x256xbf16, #tpu.memory_space<vmem>> -> memref<128x256xbf16, #tpu.memory_space<vmem>>
    %42 = tpu.memref_slice %arg13[%c0_i32_41] : memref<2x!tpu.dma_semaphore, #tpu.memory_space<semaphore_mem>> -> memref<1x!tpu.dma_semaphore, #tpu.memory_space<semaphore_mem>>
    %43 = tpu.memref_squeeze %42 : memref<1x!tpu.dma_semaphore, #tpu.memory_space<semaphore_mem>> -> memref<!tpu.dma_semaphore, #tpu.memory_space<semaphore_mem>>
    tpu.enqueue_dma source(%39 : memref<128x256xbf16, #tpu.memory_space<any>>) target(%41 : memref<128x256xbf16, #tpu.memory_space<vmem>>) target_semaphore(%43 : memref<!tpu.dma_semaphore, #tpu.memory_space<semaphore_mem>>)
    %c0_46 = arith.constant 0 : index
    %c0_47 = arith.constant 0 : index
    %44 = vector.load %arg11[%c0_46, %c0_47] : memref<8x256xbf16, #tpu.memory_space<vmem>>, vector<8x256xbf16>
    %c1 = arith.constant 1 : index
    %c0_48 = arith.constant 0 : index
    %c0_49 = arith.constant 0 : index
    %45 = vector.load %arg12[%c1, %c0_48, %c0_49] : memref<2x256x256xbf16, #tpu.memory_space<vmem>>, vector<1x256x128xbf16>
    %46 = vector.shape_cast %45 : vector<1x256x128xbf16> to vector<256x128xbf16>
    %cst_50 = arith.constant dense<0.000000e+00> : vector<8x128xf32>
    %47 = tpu.matmul %44, %46, %cst_50 {dimension_numbers = #tpu.dot_dimension_numbers<[1], [0], [0], [1], [0, 0, 1, 1], [], []>} : vector<8x256xbf16>, vector<256x128xbf16>, vector<8x128xf32> -> vector<8x128xf32>
    %c0_51 = arith.constant 0 : index
    %c0_52 = arith.constant 0 : index
    %48 = vector.load %arg4[%c0_51, %c0_52] : memref<1x128xf32, #tpu.memory_space<vmem>>, vector<1x128xf32>
    %49 = vector.broadcast %48 : vector<1x128xf32> to vector<8x128xf32>
    %50 = arith.addf %47, %49 : vector<8x128xf32>
    %cst_53 = arith.constant 0.000000e+00 : f32
    %51 = vector.broadcast %cst_53 : f32 to vector<8x128xf32>
    %52 = arith.maximumf %50, %51 : vector<8x128xf32>
    %53 = arith.truncf %52 : vector<8x128xf32> to vector<8x128xbf16>
    %c0_54 = arith.constant 0 : index
    %c0_55 = arith.constant 0 : index
    %54 = vector.load %arg10[%c0_54, %c0_55] : memref<8x256xbf16, #tpu.memory_space<vmem>>, vector<8x128xbf16>
    tpu.vector_store %arg10[%c0_54, %c0_55], %53 {strides = array<i32>} : memref<8x256xbf16, #tpu.memory_space<vmem>>, vector<8x128xbf16>,
    %c0_i32_56 = arith.constant 0 : i32
    %c0_i32_57 = arith.constant 0 : i32
    %c0_i32_58 = arith.constant 0 : i32
    %c0_i32_59 = arith.constant 0 : i32
    %c0_i32_60 = arith.constant 0 : i32
    %55 = tpu.memref_slice %arg5[%c0_i32_56, %c0_i32_59, %c0_i32_60] : memref<1x128x256xbf16, #tpu.memory_space<any>> -> memref<1x128x256xbf16, #tpu.memory_space<any>>
    %56 = tpu.memref_squeeze %55 : memref<1x128x256xbf16, #tpu.memory_space<any>> -> memref<128x256xbf16, #tpu.memory_space<any>>
    %c0_i32_61 = arith.constant 0 : i32
    %c0_i32_62 = arith.constant 0 : i32
    %57 = tpu.memref_slice %arg12[%c0_i32_57, %c0_i32_61, %c0_i32_62] : memref<2x256x256xbf16, #tpu.memory_space<vmem>> -> memref<1x128x256xbf16, #tpu.memory_space<vmem>>
    %58 = tpu.memref_squeeze %57 : memref<1x128x256xbf16, #tpu.memory_space<vmem>> -> memref<128x256xbf16, #tpu.memory_space<vmem>>
    %59 = tpu.memref_slice %arg13[%c0_i32_58] : memref<2x!tpu.dma_semaphore, #tpu.memory_space<semaphore_mem>> -> memref<1x!tpu.dma_semaphore, #tpu.memory_space<semaphore_mem>>
    %60 = tpu.memref_squeeze %59 : memref<1x!tpu.dma_semaphore, #tpu.memory_space<semaphore_mem>> -> memref<!tpu.dma_semaphore, #tpu.memory_space<semaphore_mem>>
    tpu.wait_dma2 semaphore(%60 : memref<!tpu.dma_semaphore, #tpu.memory_space<semaphore_mem>>) src(%56 : memref<128x256xbf16, #tpu.memory_space<any>>) dst(%58 : memref<128x256xbf16, #tpu.memory_space<vmem>>)
    %c0_i32_63 = arith.constant 0 : i32
    %c1_i32_64 = arith.constant 1 : i32
    %c1_i32_65 = arith.constant 1 : i32
    %c0_i32_66 = arith.constant 0 : i32
    %c0_i32_67 = arith.constant 0 : i32
    %61 = tpu.memref_slice %arg7[%c0_i32_63, %c0_i32_66, %c0_i32_67] : memref<1x256x128xbf16, #tpu.memory_space<any>> -> memref<1x256x128xbf16, #tpu.memory_space<any>>
    %62 = tpu.memref_squeeze %61 : memref<1x256x128xbf16, #tpu.memory_space<any>> -> memref<256x128xbf16, #tpu.memory_space<any>>
    %c0_i32_68 = arith.constant 0 : i32
    %c0_i32_69 = arith.constant 0 : i32
    %63 = tpu.memref_slice %arg12[%c1_i32_64, %c0_i32_68, %c0_i32_69] : memref<2x256x256xbf16, #tpu.memory_space<vmem>> -> memref<1x256x128xbf16, #tpu.memory_space<vmem>>
    %64 = tpu.memref_squeeze %63 : memref<1x256x128xbf16, #tpu.memory_space<vmem>> -> memref<256x128xbf16, #tpu.memory_space<vmem>>
    %65 = tpu.memref_slice %arg13[%c1_i32_65] : memref<2x!tpu.dma_semaphore, #tpu.memory_space<semaphore_mem>> -> memref<1x!tpu.dma_semaphore, #tpu.memory_space<semaphore_mem>>
    %66 = tpu.memref_squeeze %65 : memref<1x!tpu.dma_semaphore, #tpu.memory_space<semaphore_mem>> -> memref<!tpu.dma_semaphore, #tpu.memory_space<semaphore_mem>>
    tpu.enqueue_dma source(%62 : memref<256x128xbf16, #tpu.memory_space<any>>) target(%64 : memref<256x128xbf16, #tpu.memory_space<vmem>>) target_semaphore(%66 : memref<!tpu.dma_semaphore, #tpu.memory_space<semaphore_mem>>)
    %c0_70 = arith.constant 0 : index
    %c0_71 = arith.constant 0 : index
    %67 = vector.load %arg10[%c0_70, %c0_71] : memref<8x256xbf16, #tpu.memory_space<vmem>>, vector<8x128xbf16>
    %c0_72 = arith.constant 0 : index
    %c0_73 = arith.constant 0 : index
    %c0_74 = arith.constant 0 : index
    %68 = vector.load %arg12[%c0_72, %c0_73, %c0_74] : memref<2x256x256xbf16, #tpu.memory_space<vmem>>, vector<1x128x256xbf16>
    %69 = vector.shape_cast %68 : vector<1x128x256xbf16> to vector<128x256xbf16>
    %cst_75 = arith.constant dense<0.000000e+00> : vector<8x256xf32>
    %70 = tpu.matmul %67, %69, %cst_75 {dimension_numbers = #tpu.dot_dimension_numbers<[1], [0], [0], [1], [0, 0, 1, 1], [], []>} : vector<8x128xbf16>, vector<128x256xbf16>, vector<8x256xf32> -> vector<8x256xf32>
    %c0_76 = arith.constant 0 : index
    %c0_77 = arith.constant 0 : index
    %71 = vector.load %arg6[%c0_76, %c0_77] : memref<1x256xf32, #tpu.memory_space<vmem>>, vector<1x256xf32>
    %72 = vector.broadcast %71 : vector<1x256xf32> to vector<8x256xf32>
    %73 = arith.addf %70, %72 : vector<8x256xf32>
    %cst_78 = arith.constant 0.000000e+00 : f32
    %74 = vector.broadcast %cst_78 : f32 to vector<8x256xf32>
    %75 = arith.maximumf %73, %74 : vector<8x256xf32>
    %76 = arith.truncf %75 : vector<8x256xf32> to vector<8x256xbf16>
    %c0_79 = arith.constant 0 : index
    %c0_80 = arith.constant 0 : index
    %77 = vector.load %arg11[%c0_79, %c0_80] : memref<8x256xbf16, #tpu.memory_space<vmem>>, vector<8x256xbf16>
    tpu.vector_store %arg11[%c0_79, %c0_80], %76 {strides = array<i32>} : memref<8x256xbf16, #tpu.memory_space<vmem>>, vector<8x256xbf16>,
    %c0_i32_81 = arith.constant 0 : i32
    %c1_i32_82 = arith.constant 1 : i32
    %c1_i32_83 = arith.constant 1 : i32
    %c0_i32_84 = arith.constant 0 : i32
    %c0_i32_85 = arith.constant 0 : i32
    %78 = tpu.memref_slice %arg7[%c0_i32_81, %c0_i32_84, %c0_i32_85] : memref<1x256x128xbf16, #tpu.memory_space<any>> -> memref<1x256x128xbf16, #tpu.memory_space<any>>
    %79 = tpu.memref_squeeze %78 : memref<1x256x128xbf16, #tpu.memory_space<any>> -> memref<256x128xbf16, #tpu.memory_space<any>>
    %c0_i32_86 = arith.constant 0 : i32
    %c0_i32_87 = arith.constant 0 : i32
    %80 = tpu.memref_slice %arg12[%c1_i32_82, %c0_i32_86, %c0_i32_87] : memref<2x256x256xbf16, #tpu.memory_space<vmem>> -> memref<1x256x128xbf16, #tpu.memory_space<vmem>>
    %81 = tpu.memref_squeeze %80 : memref<1x256x128xbf16, #tpu.memory_space<vmem>> -> memref<256x128xbf16, #tpu.memory_space<vmem>>
    %82 = tpu.memref_slice %arg13[%c1_i32_83] : memref<2x!tpu.dma_semaphore, #tpu.memory_space<semaphore_mem>> -> memref<1x!tpu.dma_semaphore, #tpu.memory_space<semaphore_mem>>
    %83 = tpu.memref_squeeze %82 : memref<1x!tpu.dma_semaphore, #tpu.memory_space<semaphore_mem>> -> memref<!tpu.dma_semaphore, #tpu.memory_space<semaphore_mem>>
    tpu.wait_dma2 semaphore(%83 : memref<!tpu.dma_semaphore, #tpu.memory_space<semaphore_mem>>) src(%79 : memref<256x128xbf16, #tpu.memory_space<any>>) dst(%81 : memref<256x128xbf16, #tpu.memory_space<vmem>>)
    %c0_88 = arith.constant 0 : index
    %c0_89 = arith.constant 0 : index
    %84 = vector.load %arg11[%c0_88, %c0_89] : memref<8x256xbf16, #tpu.memory_space<vmem>>, vector<8x256xbf16>
    %c1_90 = arith.constant 1 : index
    %c0_91 = arith.constant 0 : index
    %c0_92 = arith.constant 0 : index
    %85 = vector.load %arg12[%c1_90, %c0_91, %c0_92] : memref<2x256x256xbf16, #tpu.memory_space<vmem>>, vector<1x256x128xbf16>
    %86 = vector.shape_cast %85 : vector<1x256x128xbf16> to vector<256x128xbf16>
    %cst_93 = arith.constant dense<0.000000e+00> : vector<8x128xf32>
    %87 = tpu.matmul %84, %86, %cst_93 {dimension_numbers = #tpu.dot_dimension_numbers<[1], [0], [0], [1], [0, 0, 1, 1], [], []>} : vector<8x256xbf16>, vector<256x128xbf16>, vector<8x128xf32> -> vector<8x128xf32>
    %c0_94 = arith.constant 0 : index
    %c0_95 = arith.constant 0 : index
    %88 = vector.load %arg8[%c0_94, %c0_95] : memref<1x128xf32, #tpu.memory_space<vmem>>, vector<1x128xf32>
    %89 = vector.broadcast %88 : vector<1x128xf32> to vector<8x128xf32>
    %90 = arith.addf %87, %89 : vector<8x128xf32>
    %c0_96 = arith.constant 0 : index
    %c0_97 = arith.constant 0 : index
    %91 = vector.load %arg9[%c0_96, %c0_97] : memref<8x128xf32, #tpu.memory_space<vmem>>, vector<8x128xf32>
    tpu.vector_store %arg9[%c0_96, %c0_97], %90 {strides = array<i32>} : memref<8x128xf32, #tpu.memory_space<vmem>>, vector<8x128xf32>,
    return
  }
}

</mosaic_0001>

<llo_original>
// kernel: mlp_latent_forward.1
$region0: #{mlp_latent_forward.1}
  #allocation0 [shape = 'u32[]', space=smem, size = 0x4, offset = 0x4, fixed_abs, tag = 'smem constant byte address 0x4 - core index']
  #allocation1 [shape = 'u32[144,128]{1,0:T(1,128)}', space=vmem, size = 0x12000, scoped, tag = 'internal scratch']
  #allocation2 [shape = 'bf16[8,256]{1,0:T(8,128)(2,1)}', space=vmem, size = 0x1000, scoped, tag = 'scratch operand']
  #allocation3 [shape = 'bf16[8,256]{1,0:T(8,128)(2,1)}', space=vmem, size = 0x1000, scoped, tag = 'scratch operand']
  #allocation4 [shape = 'bf16[2,256,256]{2,1,0:T(16,128)(2,1)}', space=vmem, size = 0x40000, scoped, tag = 'scratch operand']
  #allocation5 [shape = 's32[2]{0}', space=sflag, size = 0x8, scoped, tag = 'scratch operand']
  #allocation10 [shape = 's32[]', space=sflag, size = 0x4, offset = 0, fixed_abs, tag = 'sflag constant byte address 0x0 - dummy sync flag']
  #allocation12 [shape = 's32[]', space=sflag, size = 0x4, offset = 0, fixed_abs, tag = 'sflag constant byte address 0x0 - dummy sync flag']
  #allocation13 [shape = 's32[]', space=sflag, size = 0x4, offset = 0, fixed_abs, tag = 'sflag constant byte address 0x0 - dummy sync flag']
  #allocation15 [shape = 's32[]', space=sflag, size = 0x4, offset = 0, fixed_abs, tag = 'sflag constant byte address 0x0 - dummy sync flag']
  %s0 = inlined_call_operand.hbm [shape: f32[8,128], index: 0, kind: input, shape index: {}]
  %s1 = inlined_call_operand.hbm [shape: bf16[1,128,256], index: 1, kind: input, shape index: {}]
  %s2 = inlined_call_operand.vmem [shape: f32[1,256], index: 2, kind: input, shape index: {}]
  %s3 = inlined_call_operand.hbm [shape: bf16[1,256,128], index: 3, kind: input, shape index: {}]
  %s4 = inlined_call_operand.vmem [shape: f32[1,128], index: 4, kind: input, shape index: {}]
  %s5 = inlined_call_operand.hbm [shape: bf16[1,128,256], index: 5, kind: input, shape index: {}]
  %s6 = inlined_call_operand.vmem [shape: f32[1,256], index: 6, kind: input, shape index: {}]
  %s7 = inlined_call_operand.hbm [shape: bf16[1,256,128], index: 7, kind: input, shape index: {}]
  %s8 = inlined_call_operand.vmem [shape: f32[1,128], index: 8, kind: input, shape index: {}]
  %s9 = inlined_call_operand.hbm [shape: f32[8,128], index: 9, kind: output, shape index: {}]
  %s10 = sld [smem:[#allocation0]]
  $region34: #{mlp_latent_forward.1} parent=0
    _
  %s12 = ssub.s32 1, %s10
  %s13 = scalar_select 0, %s12, %s10
  $region1: #{mlp_latent_forward.1} parent=0
    #allocation6 [shape = 'u8[4096]{0}', space=vmem, size = 0x1000, scoped, tag = 'input window, operand 0, single buffered']
    #allocation7 [shape = 's32[1]{0}', space=sflag, size = 0x4, scoped, tag = 'scoped memory for mlp_latent_forward.1']
    #allocation8 [shape = 's32[1]{0}', space=sflag, size = 0x4, scoped, tag = 'scoped memory for mlp_latent_forward.1']
    #allocation9 [shape = 'u8[4096]{0}', space=vmem, size = 0x1000, scoped, tag = 'output window, operand 0, single buffered']
    #allocation11 [shape = 'u32[9]{0}', space=smem, size = 0x24, scoped, tag = 'DMA stride descriptor']
    #allocation14 [shape = 'u32[9]{0}', space=smem, size = 0x24, scoped, tag = 'DMA stride descriptor']
    %14 = vsyncpa [#allocation7], 0
    %15 = vsyncpa [#allocation8], 0
    // Predicated region
    $region2: #{mlp_latent_forward.1} parent=1 // pred_check
      _
    $region3: #{mlp_latent_forward.1} parent=1 // pred_check_branch
      %17 = sbr.rel (0) target = $region5
    $region4: #{mlp_latent_forward.1} parent=1 // pred_region
      %s19 = ssub.s32 128, 128
      %20 = vsyncadd [#allocation7], %s19
      %s22 = sshll.u32 [#allocation6], 4
      %s23 = int_to_ptr.vmem [resolvable:$true] %s22
      %25 = dma.hbm_to_vmem [thread:$0]  %s0, 128, %s23, [#allocation7]
    $region5: #{mlp_latent_forward.1} parent=1 // pred_fallthru
      _
    // Predicated region
    $region6: #{mlp_latent_forward.1} parent=1 // pred_check
      _
    $region7: #{mlp_latent_forward.1} parent=1 // pred_check_branch
      %27 = sbr.rel (0) target = $region9
    $region8: #{mlp_latent_forward.1} parent=1 // pred_region
      _
    $region9: #{mlp_latent_forward.1} parent=1 // pred_fallthru
      _
    // Predicated region
    $region10: #{mlp_latent_forward.1} parent=1 // pred_check
      _
    $region11: #{mlp_latent_forward.1} parent=1 // pred_check_branch
      %29 = sbr.rel (0) target = $region13
    $region12: #{mlp_latent_forward.1} parent=1 // pred_region
      _
    $region13: #{mlp_latent_forward.1} parent=1 // pred_fallthru
      _
    // Predicated region
    $region14: #{mlp_latent_forward.1} parent=1 // pred_check
      _
    $region15: #{mlp_latent_forward.1} parent=1 // pred_check_branch
      %31 = sbr.rel (0) target = $region17
    $region16: #{mlp_latent_forward.1} parent=1 // pred_region
      _
    $region17: #{mlp_latent_forward.1} parent=1 // pred_fallthru
      _
    // Predicated region
    $region18: #{mlp_latent_forward.1} parent=1 // pred_check
      _
    $region19: #{mlp_latent_forward.1} parent=1 // pred_check_branch
      %33 = sbr.rel (0) target = $region21
    $region20: #{mlp_latent_forward.1} parent=1 // pred_region
      _
    $region21: #{mlp_latent_forward.1} parent=1 // pred_fallthru
      _
    // Predicated region
    $region22: #{mlp_latent_forward.1} parent=1 // pred_check
      _
    $region23: #{mlp_latent_forward.1} parent=1 // pred_check_branch
      %35 = sbr.rel (0) target = $region25
    $region24: #{mlp_latent_forward.1} parent=1 // pred_region
      %36 = dma.done [#allocation7], 128
    $region25: #{mlp_latent_forward.1} parent=1 // pred_fallthru
      _
    %s39 = sshll.u32 1, 14
    %s40 = sxor.u32 4294967295, %s39
    %s42 = sld [smem:[#allocation0]]
    %s43 = sadd.s32 2, %s42
    %s45 = sshll.u32 7, 26
    %s46 = sxor.u32 4294967295, %s45
    %s47 = sand.u32 0, %s46
    %s48 = sshll.u32 %s43, 26
    %s49 = sor.u32 %s47, %s48
    %s50 = sshll.u32 [#allocation4], 4
    %s51 = int_to_ptr.vmem [resolvable:$true] %s50
    %54 = sst [smem:[#allocation11]] 256
    %s55 = scalar_lea.smem [#allocation11], 1
    %56 = sst [smem:[%s55]] 256
    %s57 = scalar_lea.smem [#allocation11], 2
    %58 = sst [smem:[%s57]] 2
    %s59 = scalar_lea.smem [#allocation11], 3
    %60 = sst [smem:[%s59]] 64
    %s61 = scalar_lea.smem [#allocation11], 4
    %62 = sst [smem:[%s61]] 128
    %s63 = scalar_lea.smem [#allocation11], 5
    %64 = sst [smem:[%s63]] 2
    %s65 = scalar_lea.smem [#allocation11], 6
    %66 = sst [smem:[%s65]] 128
    %s67 = scalar_lea.smem [#allocation11], 7
    %68 = sst [smem:[%s67]] 64
    %s69 = scalar_lea.smem [#allocation11], 8
    %70 = sst [smem:[%s69]] 4
    %72 = dma.general %s1, 2048, %s51, [#allocation5], [#allocation10], [#allocation11], %s49, 0
    %v73 = vld [vmem:[#allocation6] sm:$0xff]
    %v74 = vpack.c.bf16 %v73, %v73
    %75 = vst [vmem:[#allocation2] sm:$0xf] %v74
    %s76 = smul.u32 4, 16
    %s77 = smul.u32 %s76, 2
    %s78 = sshll.u32 %s77, 4
    %79 = dma.done [#allocation5], %s78
    %s80 = scalar_lea.vmem [#allocation4], 256
    %s81 = scalar_lea.sflag [#allocation5], 1
    %s83 = sshll.u32 %s80, 4
    %s84 = int_to_ptr.vmem [resolvable:$true] %s83
    %86 = dma.hbm_to_vmem [thread:$0]  %s3, 2048, %s84, %s81, 128, 256, 8
    %v87 = vld [vmem:[#allocation2] sm:$0xf]
    %v88 = vld [vmem:[#allocation4] sm:$0xff]
    %v89 = vld [vmem:[#allocation4 + $0x8] sm:$0xff]
    %v90 = vld [vmem:[#allocation4 + $0x10] sm:$0xff]
    %v91 = vld [vmem:[#allocation4 + $0x18] sm:$0xff]
    %v92 = vld [vmem:[#allocation4 + $0x20] sm:$0xff]
    %v93 = vld [vmem:[#allocation4 + $0x28] sm:$0xff]
    %v94 = vld [vmem:[#allocation4 + $0x30] sm:$0xff]
    %v95 = vld [vmem:[#allocation4 + $0x38] sm:$0xff]
    %v96 = vld [vmem:[#allocation4 + $0x40] sm:$0xff]
    %v97 = vld [vmem:[#allocation4 + $0x48] sm:$0xff]
    %v98 = vld [vmem:[#allocation4 + $0x50] sm:$0xff]
    %v99 = vld [vmem:[#allocation4 + $0x58] sm:$0xff]
    %v100 = vld [vmem:[#allocation4 + $0x60] sm:$0xff]
    %v101 = vld [vmem:[#allocation4 + $0x68] sm:$0xff]
    %v102 = vld [vmem:[#allocation4 + $0x70] sm:$0xff]
    %v103 = vld [vmem:[#allocation4 + $0x78] sm:$0xff]
    %v104 = vld [vmem:[%s2] sm:$0x3]
    %v106 = vlaneseq
    %v107 = vshrl.u32 %v106, 7
    %v108 = vsub.s32 0, %v107
    %v109 = vrot.slane %v104, %v108
    %v110 = vlaneseq
    %v111 = vshrl.u32 %v110, 7
    %v112 = vsub.s32 1, %v111
    %v113 = vrot.slane %v104, %v112
    %116 = vmatprep.subr.bf16.mxu0 %v89
    %117 = vmatpush1.bf16.msra.mxu0 %v88
    %118 = vmatprep.subr.bf16.mxu0 %v91
    %119 = vmatpush1.bf16.msra.mxu0 %v90
    %120 = vmatprep.subr.bf16.mxu0 %v93
    %121 = vmatpush1.bf16.msra.mxu0 %v92
    %122 = vmatprep.subr.bf16.mxu0 %v95
    %123 = vmatpush1.bf16.msra.mxu0 %v94
    %124 = vmatprep.subr.bf16.mxu0 %v97
    %125 = vmatpush1.bf16.msra.mxu0 %v96
    %126 = vmatprep.subr.bf16.mxu0 %v99
    %127 = vmatpush1.bf16.msra.mxu0 %v98
    %128 = vmatprep.subr.bf16.mxu0 %v101
    %129 = vmatpush1.bf16.msra.mxu0 %v100
    %130 = vmatprep.subr.bf16.mxu0 %v103
    %131 = vmatpush1.bf16.msra.mxu0 %v102
    %132 = vmatprep.subr.bf16.mxu0 0
    %133 = vmatpush1.bf16.msra.mxu0 0
    %134 = vmatprep.subr.bf16.mxu0 0
    %135 = vmatpush1.bf16.msra.mxu0 0
    %136 = vmatprep.subr.bf16.mxu0 0
    %137 = vmatpush1.bf16.msra.mxu0 0
    %138 = vmatprep.subr.bf16.mxu0 0
    %139 = vmatpush1.bf16.msra.mxu0 0
    %140 = vmatprep.subr.bf16.mxu0 0
    %141 = vmatpush1.bf16.msra.mxu0 0
    %142 = vmatprep.subr.bf16.mxu0 0
    %143 = vmatpush1.bf16.msra.mxu0 0
    %144 = vmatprep.subr.bf16.mxu0 0
    %145 = vmatpush1.bf16.msra.mxu0 0
    %146 = vmatprep.subr.bf16.mxu0 0
    %147 = vmatpush1.bf16.msra.mxu0 0
    %148 = vmatprep.mubr.bf16.mxu0 0
    %149 = vmatmul.mubr.bf16.gmra.mrb[0].mxu0 %v87
    %v150 = vpop.f32.mrb[0].mxu0
    %v151 = vadd.f32 %v109, %v150
    %v152 = vpop.f32.mrb[0].mxu0
    %v153 = vadd.f32 %v113, %v152
    %v154 = vpop.f32.mrb[0].mxu0
    %v155 = vpop.f32.mrb[0].mxu0
    %156 = vdwg.mxu0
    %v157 = vmax.f32 %v151, 0.0
    %v158 = vmax.f32 %v153, 0.0
    %v159 = vpack.c.bf16 %v157, %v157
    %v160 = vpack.c.bf16 %v158, %v158
    %v163 = vunpack.c.l.b16 %v159
    %v164 = vunpack.c.l.b16 %v160
    %v165 = vpack.c.b16 %v164, %v163
    %167 = vst [vmem:[#allocation3] sm:$0xff] %v165
    %s168 = smul.u32 4, 32
    %s169 = smul.u32 %s168, 1
    %s170 = sshll.u32 %s169, 4
    %171 = dma.done %s81, %s170
    %s173 = sshll.u32 1, 14
    %s174 = sxor.u32 4294967295, %s173
    %s176 = sadd.s32 2, %s42
    %s178 = sshll.u32 7, 26
    %s179 = sxor.u32 4294967295, %s178
    %s180 = sand.u32 0, %s179
    %s181 = sshll.u32 %s176, 26
    %s182 = sor.u32 %s180, %s181
    %s183 = sshll.u32 [#allocation4], 4
    %s184 = int_to_ptr.vmem [resolvable:$true] %s183
    %187 = sst [smem:[#allocation14]] 256
    %s188 = scalar_lea.smem [#allocation14], 1
    %189 = sst [smem:[%s188]] 256
    %s190 = scalar_lea.smem [#allocation14], 2
    %191 = sst [smem:[%s190]] 2
    %s192 = scalar_lea.smem [#allocation14], 3
    %193 = sst [smem:[%s192]] 64
    %s194 = scalar_lea.smem [#allocation14], 4
    %195 = sst [smem:[%s194]] 128
    %s196 = scalar_lea.smem [#allocation14], 5
    %197 = sst [smem:[%s196]] 2
    %s198 = scalar_lea.smem [#allocation14], 6
    %199 = sst [smem:[%s198]] 128
    %s200 = scalar_lea.smem [#allocation14], 7
    %201 = sst [smem:[%s200]] 64
    %s202 = scalar_lea.smem [#allocation14], 8
    %203 = sst [smem:[%s202]] 4
    %205 = dma.general %s5, 2048, %s184, [#allocation5], [#allocation13], [#allocation14], %s182, 0
    %v206 = vld [vmem:[#allocation3] sm:$0xff]
    %v207 = vld [vmem:[%s80] sm:$0xff]
    %v208 = vld [vmem:[%s80 + $0x10] sm:$0xff]
    %v209 = vld [vmem:[%s80 + $0x20] sm:$0xff]
    %v210 = vld [vmem:[%s80 + $0x30] sm:$0xff]
    %v211 = vld [vmem:[%s80 + $0x40] sm:$0xff]
    %v212 = vld [vmem:[%s80 + $0x50] sm:$0xff]
    %v213 = vld [vmem:[%s80 + $0x60] sm:$0xff]
    %v214 = vld [vmem:[%s80 + $0x70] sm:$0xff]
    %v215 = vld [vmem:[%s80 + $0x80] sm:$0xff]
    %v216 = vld [vmem:[%s80 + $0x90] sm:$0xff]
    %v217 = vld [vmem:[%s80 + $0xa0] sm:$0xff]
    %v218 = vld [vmem:[%s80 + $0xb0] sm:$0xff]
    %v219 = vld [vmem:[%s80 + $0xc0] sm:$0xff]
    %v220 = vld [vmem:[%s80 + $0xd0] sm:$0xff]
    %v221 = vld [vmem:[%s80 + $0xe0] sm:$0xff]
    %v222 = vld [vmem:[%s80 + $0xf0] sm:$0xff]
    %v223 = vld [vmem:[%s4] sm:$0x1]
    %v225 = vlaneseq
    %v226 = vshrl.u32 %v225, 7
    %v227 = vsub.s32 0, %v226
    %v228 = vrot.slane %v223, %v227
    %v231 = vunpack.c.l.b16 %v206
    %v232 = vunpack.c.h.b16 %v206
    %v233 = vpack.c.b16 %v231, %v231
    %v234 = vpack.c.b16 %v232, %v232
    %237 = vmatprep.subr.bf16.mxu0 0
    %238 = vmatpush1.bf16.msra.mxu0 %v207
    %239 = vmatprep.subr.bf16.mxu0 0
    %240 = vmatpush1.bf16.msra.mxu0 %v208
    %241 = vmatprep.subr.bf16.mxu0 0
    %242 = vmatpush1.bf16.msra.mxu0 %v209
    %243 = vmatprep.subr.bf16.mxu0 0
    %244 = vmatpush1.bf16.msra.mxu0 %v210
    %245 = vmatprep.subr.bf16.mxu0 0
    %246 = vmatpush1.bf16.msra.mxu0 %v211
    %247 = vmatprep.subr.bf16.mxu0 0
    %248 = vmatpush1.bf16.msra.mxu0 %v212
    %249 = vmatprep.subr.bf16.mxu0 0
    %250 = vmatpush1.bf16.msra.mxu0 %v213
    %251 = vmatprep.subr.bf16.mxu0 0
    %252 = vmatpush1.bf16.msra.mxu0 %v214
    %253 = vmatprep.subr.bf16.mxu0 0
    %254 = vmatpush1.bf16.msra.mxu0 %v215
    %255 = vmatprep.subr.bf16.mxu0 0
    %256 = vmatpush1.bf16.msra.mxu0 %v216
    %257 = vmatprep.subr.bf16.mxu0 0
    %258 = vmatpush1.bf16.msra.mxu0 %v217
    %259 = vmatprep.subr.bf16.mxu0 0
    %260 = vmatpush1.bf16.msra.mxu0 %v218
    %261 = vmatprep.subr.bf16.mxu0 0
    %262 = vmatpush1.bf16.msra.mxu0 %v219
    %263 = vmatprep.subr.bf16.mxu0 0
    %264 = vmatpush1.bf16.msra.mxu0 %v220
    %265 = vmatprep.subr.bf16.mxu0 0
    %266 = vmatpush1.bf16.msra.mxu0 %v221
    %267 = vmatprep.subr.bf16.mxu0 0
    %268 = vmatpush1.bf16.msra.mxu0 %v222
    %269 = vmatprep.mubr.bf16.mxu0 %v234
    %270 = vmatmul.mubr.bf16.gmra.mrb[0].mxu0 %v233
    %v271 = vpop.f32.mrb[0].mxu0
    %v272 = vadd.f32 %v228, %v271
    %v273 = vpop.f32.mrb[0].mxu0
    %v274 = vpop.f32.mrb[0].mxu0
    %v275 = vpop.f32.mrb[0].mxu0
    %276 = vdwg.mxu0
    %v277 = vmax.f32 %v272, 0.0
    %v278 = vpack.c.bf16 %v277, %v277
    %279 = vst [vmem:[#allocation2] sm:$0xf] %v278
    %s280 = sshll.u32 %s77, 4
    %281 = dma.done [#allocation5], %s280
    %s283 = sshll.u32 %s80, 4
    %s284 = int_to_ptr.vmem [resolvable:$true] %s283
    %286 = dma.hbm_to_vmem [thread:$0]  %s7, 2048, %s284, %s81, 128, 256, 8
    %v287 = vld [vmem:[#allocation2] sm:$0xf]
    %v288 = vld [vmem:[#allocation4] sm:$0xff]
    %v289 = vld [vmem:[#allocation4 + $0x8] sm:$0xff]
    %v290 = vld [vmem:[#allocation4 + $0x10] sm:$0xff]
    %v291 = vld [vmem:[#allocation4 + $0x18] sm:$0xff]
    %v292 = vld [vmem:[#allocation4 + $0x20] sm:$0xff]
    %v293 = vld [vmem:[#allocation4 + $0x28] sm:$0xff]
    %v294 = vld [vmem:[#allocation4 + $0x30] sm:$0xff]
    %v295 = vld [vmem:[#allocation4 + $0x38] sm:$0xff]
    %v296 = vld [vmem:[#allocation4 + $0x40] sm:$0xff]
    %v297 = vld [vmem:[#allocation4 + $0x48] sm:$0xff]
    %v298 = vld [vmem:[#allocation4 + $0x50] sm:$0xff]
    %v299 = vld [vmem:[#allocation4 + $0x58] sm:$0xff]
    %v300 = vld [vmem:[#allocation4 + $0x60] sm:$0xff]
    %v301 = vld [vmem:[#allocation4 + $0x68] sm:$0xff]
    %v302 = vld [vmem:[#allocation4 + $0x70] sm:$0xff]
    %v303 = vld [vmem:[#allocation4 + $0x78] sm:$0xff]
    %v304 = vld [vmem:[%s6] sm:$0x3]
    %v306 = vlaneseq
    %v307 = vshrl.u32 %v306, 7
    %v308 = vsub.s32 0, %v307
    %v309 = vrot.slane %v304, %v308
    %v310 = vlaneseq
    %v311 = vshrl.u32 %v310, 7
    %v312 = vsub.s32 1, %v311
    %v313 = vrot.slane %v304, %v312
    %316 = vmatprep.subr.bf16.mxu0 %v289
    %317 = vmatpush1.bf16.msra.mxu0 %v288
    %318 = vmatprep.subr.bf16.mxu0 %v291
    %319 = vmatpush1.bf16.msra.mxu0 %v290
    %320 = vmatprep.subr.bf16.mxu0 %v293
    %321 = vmatpush1.bf16.msra.mxu0 %v292
    %322 = vmatprep.subr.bf16.mxu0 %v295
    %323 = vmatpush1.bf16.msra.mxu0 %v294
    %324 = vmatprep.subr.bf16.mxu0 %v297
    %325 = vmatpush1.bf16.msra.mxu0 %v296
    %326 = vmatprep.subr.bf16.mxu0 %v299
    %327 = vmatpush1.bf16.msra.mxu0 %v298
    %328 = vmatprep.subr.bf16.mxu0 %v301
    %329 = vmatpush1.bf16.msra.mxu0 %v300
    %330 = vmatprep.subr.bf16.mxu0 %v303
    %331 = vmatpush1.bf16.msra.mxu0 %v302
    %332 = vmatprep.subr.bf16.mxu0 0
    %333 = vmatpush1.bf16.msra.mxu0 0
    %334 = vmatprep.subr.bf16.mxu0 0
    %335 = vmatpush1.bf16.msra.mxu0 0
    %336 = vmatprep.subr.bf16.mxu0 0
    %337 = vmatpush1.bf16.msra.mxu0 0
    %338 = vmatprep.subr.bf16.mxu0 0
    %339 = vmatpush1.bf16.msra.mxu0 0
    %340 = vmatprep.subr.bf16.mxu0 0
    %341 = vmatpush1.bf16.msra.mxu0 0
    %342 = vmatprep.subr.bf16.mxu0 0
    %343 = vmatpush1.bf16.msra.mxu0 0
    %344 = vmatprep.subr.bf16.mxu0 0
    %345 = vmatpush1.bf16.msra.mxu0 0
    %346 = vmatprep.subr.bf16.mxu0 0
    %347 = vmatpush1.bf16.msra.mxu0 0
    %348 = vmatprep.mubr.bf16.mxu0 0
    %349 = vmatmul.mubr.bf16.gmra.mrb[0].mxu0 %v287
    %v350 = vpop.f32.mrb[0].mxu0
    %v351 = vadd.f32 %v309, %v350
    %v352 = vpop.f32.mrb[0].mxu0
    %v353 = vadd.f32 %v313, %v352
    %v354 = vpop.f32.mrb[0].mxu0
    %v355 = vpop.f32.mrb[0].mxu0
    %356 = vdwg.mxu0
    %v357 = vmax.f32 %v351, 0.0
    %v358 = vmax.f32 %v353, 0.0
    %v359 = vpack.c.bf16 %v357, %v357
    %v360 = vpack.c.bf16 %v358, %v358
    %v363 = vunpack.c.l.b16 %v359
    %v364 = vunpack.c.l.b16 %v360
    %v365 = vpack.c.b16 %v364, %v363
    %367 = vst [vmem:[#allocation3] sm:$0xff] %v365
    %s368 = sshll.u32 %s169, 4
    %369 = dma.done %s81, %s368
    %v370 = vld [vmem:[#allocation3] sm:$0xff]
    %v371 = vld [vmem:[%s80] sm:$0xff]
    %v372 = vld [vmem:[%s80 + $0x10] sm:$0xff]
    %v373 = vld [vmem:[%s80 + $0x20] sm:$0xff]
    %v374 = vld [vmem:[%s80 + $0x30] sm:$0xff]
    %v375 = vld [vmem:[%s80 + $0x40] sm:$0xff]
    %v376 = vld [vmem:[%s80 + $0x50] sm:$0xff]
    %v377 = vld [vmem:[%s80 + $0x60] sm:$0xff]
    %v378 = vld [vmem:[%s80 + $0x70] sm:$0xff]
    %v379 = vld [vmem:[%s80 + $0x80] sm:$0xff]
    %v380 = vld [vmem:[%s80 + $0x90] sm:$0xff]
    %v381 = vld [vmem:[%s80 + $0xa0] sm:$0xff]
    %v382 = vld [vmem:[%s80 + $0xb0] sm:$0xff]
    %v383 = vld [vmem:[%s80 + $0xc0] sm:$0xff]
    %v384 = vld [vmem:[%s80 + $0xd0] sm:$0xff]
    %v385 = vld [vmem:[%s80 + $0xe0] sm:$0xff]
    %v386 = vld [vmem:[%s80 + $0xf0] sm:$0xff]
    %v387 = vld [vmem:[%s8] sm:$0x1]
    %v389 = vlaneseq
    %v390 = vshrl.u32 %v389, 7
    %v391 = vsub.s32 0, %v390
    %v392 = vrot.slane %v387, %v391
    %v395 = vunpack.c.l.b16 %v370
    %v396 = vunpack.c.h.b16 %v370
    %v397 = vpack.c.b16 %v395, %v395
    %v398 = vpack.c.b16 %v396, %v396
    %401 = vmatprep.subr.bf16.mxu0 0
    %402 = vmatpush1.bf16.msra.mxu0 %v371
    %403 = vmatprep.subr.bf16.mxu0 0
    %404 = vmatpush1.bf16.msra.mxu0 %v372
    %405 = vmatprep.subr.bf16.mxu0 0
    %406 = vmatpush1.bf16.msra.mxu0 %v373
    %407 = vmatprep.subr.bf16.mxu0 0
    %408 = vmatpush1.bf16.msra.mxu0 %v374
    %409 = vmatprep.subr.bf16.mxu0 0
    %410 = vmatpush1.bf16.msra.mxu0 %v375
    %411 = vmatprep.subr.bf16.mxu0 0
    %412 = vmatpush1.bf16.msra.mxu0 %v376
    %413 = vmatprep.subr.bf16.mxu0 0
    %414 = vmatpush1.bf16.msra.mxu0 %v377
    %415 = vmatprep.subr.bf16.mxu0 0
    %416 = vmatpush1.bf16.msra.mxu0 %v378
    %417 = vmatprep.subr.bf16.mxu0 0
    %418 = vmatpush1.bf16.msra.mxu0 %v379
    %419 = vmatprep.subr.bf16.mxu0 0
    %420 = vmatpush1.bf16.msra.mxu0 %v380
    %421 = vmatprep.subr.bf16.mxu0 0
    %422 = vmatpush1.bf16.msra.mxu0 %v381
    %423 = vmatprep.subr.bf16.mxu0 0
    %424 = vmatpush1.bf16.msra.mxu0 %v382
    %425 = vmatprep.subr.bf16.mxu0 0
    %426 = vmatpush1.bf16.msra.mxu0 %v383
    %427 = vmatprep.subr.bf16.mxu0 0
    %428 = vmatpush1.bf16.msra.mxu0 %v384
    %429 = vmatprep.subr.bf16.mxu0 0
    %430 = vmatpush1.bf16.msra.mxu0 %v385
    %431 = vmatprep.subr.bf16.mxu0 0
    %432 = vmatpush1.bf16.msra.mxu0 %v386
    %433 = vmatprep.mubr.bf16.mxu0 %v398
    %434 = vmatmul.mubr.bf16.gmra.mrb[0].mxu0 %v397
    %v435 = vpop.f32.mrb[0].mxu0
    %v436 = vadd.f32 %v392, %v435
    %v437 = vpop.f32.mrb[0].mxu0
    %v438 = vpop.f32.mrb[0].mxu0
    %v439 = vpop.f32.mrb[0].mxu0
    %440 = vdwg.mxu0
    %441 = vst [vmem:[#allocation9] sm:$0xff] %v436
    // Predicated region
    $region26: #{mlp_latent_forward.1} parent=1 // pred_check
      _
    $region27: #{mlp_latent_forward.1} parent=1 // pred_check_branch
      %443 = sbr.rel (0) target = $region29
    $region28: #{mlp_latent_forward.1} parent=1 // pred_region
      %s445 = ssub.s32 128, 128
      %446 = vsyncadd [#allocation8], %s445
      %s448 = sshll.u32 [#allocation9], 4
      %s449 = int_to_ptr.vmem [resolvable:$true] %s448
      %451 = dma.vmem_to_hbm [thread:$0]  %s449, 128, %s9, [#allocation8]
    $region29: #{mlp_latent_forward.1} parent=1 // pred_fallthru
      _
    // Predicated region
    $region30: #{mlp_latent_forward.1} parent=1 // pred_check
      _
    $region31: #{mlp_latent_forward.1} parent=1 // pred_check_branch
      %453 = sbr.rel (0) target = $region33
    $region32: #{mlp_latent_forward.1} parent=1 // pred_region
      %454 = dma.done [#allocation8], 128
    $region33: #{mlp_latent_forward.1} parent=1 // pred_fallthru
      _
    %455 = vsyncpa [#allocation7], 1
    %456 = vsyncpa [#allocation8], 1
  %457 = vsyncmov [#allocation5]
  %s458 = vpop.sfrf %457
  %p459 = scmp.eq.s32.totalorder %s458, 0
  %p460 = pneg %p459
  %462 = shalt.err (%p460)
  %s463 = scalar_lea.sflag [#allocation5], 1
  %464 = vsyncmov %s463
  %s465 = vpop.sfrf %464
  %p466 = scmp.eq.s32.totalorder %s465, 0
  %p467 = pneg %p466
  %469 = shalt.err (%p467)

</llo_original>
